<compile_context>
chip_gen: v7x
topology: tpu7x:2x2x1
jax: 0.10.0
libtpu: 0.0.40
codegen_flags: <defaults>
</compile_context>

<pallas_src>
import functools
import math

import jax
import jax.numpy as jnp
from jax.experimental import pallas as pl
from jax.experimental.pallas import tpu as pltpu

_LANE = 128
_TARGET_BLOCK_BYTES = 2 * 1024 * 1024   # ~2 MiB streaming blocks
_MX_ROWS = 8                            # pass-1 reduction output block rows


# ----------------------------- small helpers ----------------------------------


def _vmem_capacity_bytes() -> int:
    try:
        cap = getattr(pltpu.get_tpu_info(), "vmem_capacity_bytes", None)
        if cap:
            return int(cap)
    except Exception:
        pass
    return 64 * 1024 * 1024   # conservative fallback (v7x per-TensorCore VMEM)


def _sublane(itemsize: int) -> int:
    # 8 rows for 4-byte dtypes, 16 for bf16/fp16, 32 for int8/fp8 (packed sublanes).
    return max(8, 32 // max(1, itemsize))


def _layout(x2):
    """x2: (B, n) -> lane-dense (B, rows_total, cols).

    Zero-copy (pure reshape) whenever n % 128 == 0; otherwise pads n up to the next
    multiple of 128 (a single relayout) so stores stay unmasked 128-wide.
    """
    b, n = x2.shape
    if n % _LANE == 0:
        cols = _LANE
        for c in (2048, 1024, 512, 256):
            if n % c == 0:
                cols = c
                break
        return x2.reshape(b, n // cols, cols), n // cols, cols, False
    # TODO(synk): for n % 128 != 0 this pad + final slice is one extra HBM round-trip;
    # a fully relayout-free path would require masked narrow stores instead.
    cols = _LANE
    n_pad = pl.cdiv(n, cols) * cols
    x3 = jnp.pad(x2, ((0, 0), (0, n_pad - n))).reshape(b, n_pad // cols, cols)
    return x3, n_pad // cols, cols, True


def _pick_rows(rows_total: int, cols: int, itemsize: int) -> int:
    """Rows per block: ~2 MiB blocks, sublane-aligned, or the whole slab if smaller."""
    sub = _sublane(itemsize)
    rows_b = max(sub, (_TARGET_BLOCK_BYTES // (cols * itemsize)) // sub * sub)
    return rows_total if rows_b >= rows_total else rows_b


# ----------------------------- kernels ----------------------------------------


def _elementwise_db_kernel(x_ref, o_ref, *, scale, offset, amin):
    x = x_ref[...]
    if x.dtype != jnp.float32:
        x = x.astype(jnp.float32)
    y = scale * jnp.log(jnp.maximum(x, amin))     # EUP log, constant-folded scale
    if offset != 0.0:
        y = y - offset
    o_ref[...] = y.astype(o_ref.dtype)


def _single_pass_topdb_kernel(x_ref, o_ref, *, scale, offset, amin, top_db):
    # One block == one whole per-batch slab, so the max lives in-block (1R + 1W HBM).
    x = x_ref[...]
    if x.dtype != jnp.float32:
        x = x.astype(jnp.float32)
    y = scale * jnp.log(jnp.maximum(x, amin))
    if offset != 0.0:
        y = y - offset
    o_ref[...] = jnp.maximum(y, jnp.max(y) - top_db).astype(o_ref.dtype)


def _batch_max_kernel(x_ref, mx_ref, *, rows_total, rows_b, nb,
                      scale, offset, amin, top_db):
    """Pass 1: per-batch raw max (max(x_db) is monotonic in max(x)), accumulated in a
    resident VMEM block and finalized into the dB clamp threshold on the last step."""
    j = pl.program_id(1)

    @pl.when(j == 0)
    def _init():
        mx_ref[...] = jnp.full(mx_ref.shape, -jnp.inf, dtype=mx_ref.dtype)

    x = x_ref[...]
    if x.dtype != jnp.float32:
        x = x.astype(jnp.float32)
    if rows_total % rows_b != 0:
        # Ragged last row-block: out-of-bounds rows hold stale VMEM data -> mask them.
        row = jax.lax.broadcasted_iota(jnp.int32, x.shape, 1)
        x = jnp.where(j * rows_b + row < rows_total, x, -jnp.inf)
    mx_ref[...] = jnp.maximum(mx_ref[...], jnp.max(x))

    @pl.when(j == nb - 1)
    def _finalize():
        thr = scale * jnp.log(jnp.maximum(mx_ref[...], amin))
        if offset != 0.0:
            thr = thr - offset
        mx_ref[...] = thr - top_db


def _apply_db_topdb_kernel(thr_ref, x_ref, o_ref, *, scale, offset, amin):
    """Pass 2: elementwise dB + clamp against the prefetched SMEM threshold."""
    b = pl.program_id(0)
    x = x_ref[...]
    if x.dtype != jnp.float32:
        x = x.astype(jnp.float32)
    y = scale * jnp.log(jnp.maximum(x, amin))
    if offset != 0.0:
        y = y - offset
    o_ref[...] = jnp.maximum(y, thr_ref[b]).astype(o_ref.dtype)


# ----------------------------- wrapper -----------------------------------------


def _amplitude_to_db(x, *, stype: str = "power", top_db=None,
                     force_two_pass: bool = False):
    """Pallas TPU implementation of AmplitudeToDB.forward for (..., C, F, T) inputs."""
    multiplier = 10.0 if stype == "power" else 20.0
    amin = 1e-10
    ref_value = 1.0
    db_multiplier = math.log10(max(amin, ref_value))
    scale = multiplier / math.log(10.0)      # multiplier * log10(z) == scale * ln(z)
    offset = multiplier * db_multiplier      # 0.0 when ref_value == 1.0

    orig_shape = x.shape
    itemsize = x.dtype.itemsize
    cap = _vmem_capacity_bytes()

    if top_db is None:
        # Pure elementwise: batch has no semantic meaning -> flatten the whole tensor
        # into one lane-dense slab and stream large blocks over a single grid axis.
        n_total = x.size
        x3, rows_total, cols, padded = _layout(x.reshape(1, n_total))
        rows_b = _pick_rows(rows_total, cols, itemsize)
        nb = pl.cdiv(rows_total, rows_b)
        out3 = pl.pallas_call(
            functools.partial(_elementwise_db_kernel,
                              scale=scale, offset=offset, amin=amin),
            out_shape=jax.ShapeDtypeStruct(x3.shape, x.dtype),
            grid=(nb,),
            in_specs=[pl.BlockSpec((1, rows_b, cols), lambda j: (0, j, 0))],
            out_specs=pl.BlockSpec((1, rows_b, cols), lambda j: (0, j, 0)),
            compiler_params=pltpu.CompilerParams(
                dimension_semantics=("parallel",)),
        )(x3)
        if padded:
            out3 = out3.reshape(1, -1)[:, :n_total]
        return out3.reshape(orig_shape)

    if top_db < 0:
        raise ValueError("top_db must be positive value")
    top_db = float(top_db)

    # Per-spectrogram flatten (torchaudio reshapes to (-1, C, F, T) for the clamp).
    batch = 1
    if x.ndim >= 3:
        for d in orig_shape[:-3]:
            batch *= int(d)
    n = x.size // batch
    x3, rows_total, cols, padded = _layout(x.reshape(batch, n))
    # Padded zeros map to the dB floor, which can never raise the per-batch max,
    # so including them in the reduction is safe (relies on amin > 0).

    slab_elems = rows_total * cols
    io_bytes = slab_elems * itemsize
    footprint = 4 * io_bytes + 2 * slab_elems * 4   # dbl-buffered in/out + f32 temps
    use_single_pass = (
        (not force_two_pass)
        and footprint <= (7 * cap) // 10
        # grid=(1,) cannot pipeline nor use both v7x TensorCores; only take the
        # whole-slab path for batch==1 when the slab is trivially small.
        and (batch >= 2 or io_bytes <= (2 << 20)))

    if use_single_pass:
        out3 = pl.pallas_call(
            functools.partial(_single_pass_topdb_kernel, scale=scale,
                              offset=offset, amin=amin, top_db=top_db),
            out_shape=jax.ShapeDtypeStruct(x3.shape, x.dtype),
            grid=(batch,),
            in_specs=[pl.BlockSpec((1, rows_total, cols), lambda b: (b, 0, 0))],
            out_specs=pl.BlockSpec((1, rows_total, cols), lambda b: (b, 0, 0)),
            compiler_params=pltpu.CompilerParams(
                dimension_semantics=("parallel",),
                vmem_limit_bytes=int(0.9 * cap)),
        )(x3)
    else:
        rows_b = _pick_rows(rows_total, cols, itemsize)
        nb = pl.cdiv(rows_total, rows_b)
        # Pass 1: tiled per-batch raw max, finalized into the dB threshold in-kernel.
        mx = pl.pallas_call(
            functools.partial(_batch_max_kernel, rows_total=rows_total,
                              rows_b=rows_b, nb=nb, scale=scale, offset=offset,
                              amin=amin, top_db=top_db),
            out_shape=jax.ShapeDtypeStruct((batch, _MX_ROWS, _LANE), jnp.float32),
            grid=(batch, nb),
            in_specs=[pl.BlockSpec((1, rows_b, cols), lambda b, j: (b, j, 0))],
            out_specs=pl.BlockSpec((1, _MX_ROWS, _LANE), lambda b, j: (b, 0, 0)),
            compiler_params=pltpu.CompilerParams(
                dimension_semantics=("parallel", "arbitrary")),
        )(x3)
        thr = mx[:, 0, 0]   # (batch,) f32 thresholds -> SMEM scalar prefetch
        # Pass 2: tiled elementwise dB + clamp (2 reads + 1 write total with pass 1).
        out3 = pl.pallas_call(
            functools.partial(_apply_db_topdb_kernel, scale=scale,
                              offset=offset, amin=amin),
            out_shape=jax.ShapeDtypeStruct(x3.shape, x.dtype),
            grid_spec=pltpu.PrefetchScalarGridSpec(
                num_scalar_prefetch=1,
                grid=(batch, nb),
                in_specs=[pl.BlockSpec((1, rows_b, cols),
                                       lambda b, j, thr_ref: (b, j, 0))],
                out_specs=pl.BlockSpec((1, rows_b, cols),
                                       lambda b, j, thr_ref: (b, j, 0))),
            compiler_params=pltpu.CompilerParams(
                dimension_semantics=("parallel", "parallel")),
        )(thr, x3)

    if padded:
        out3 = out3.reshape(batch, -1)[:, :n]
    return out3.reshape(orig_shape)


# Jit so the zero-copy reshapes / tiny glue ops fuse away around the pallas_calls.
amplitude_to_db = jax.jit(
    _amplitude_to_db, static_argnames=("stype", "top_db", "force_two_pass"))


# ----------------------------- reference ----------------------------------------


def _reference_amp_to_db(x, *, stype="power", top_db=None):
    """Plain-JAX reference mirroring torchaudio.functional.amplitude_to_DB."""
    multiplier = 10.0 if stype == "power" else 20.0
    amin = 1e-10
    db_multiplier = math.log10(max(amin, 1.0))
    x_db = multiplier * jnp.log10(jnp.maximum(x.astype(jnp.float32), amin))
    x_db = x_db - multiplier * db_multiplier
    if top_db is not None:
        shape = x_db.shape
        packed_channels = shape[-3] if x_db.ndim > 2 else 1
        xr = x_db.reshape(-1, packed_channels, shape[-2], shape[-1])
        mx = jnp.max(xr, axis=(-3, -2, -1), keepdims=True)
        xr = jnp.maximum(xr, mx - top_db)
        x_db = xr.reshape(shape)
    return x_db


if __name__ == "__main__":
    key = jax.random.PRNGKey(0)

    # Aligned case: total size is a multiple of 128 -> zero-copy lane-dense view.
    B, C, F, T = 2, 4, 16, 16
    x = jax.random.uniform(key, (B, C, F, T), dtype=jnp.float32) ** 2
    x = x.at[0, 0, 0, 0].set(0.0)    # exercise the amin clamp

    out_none = jax.block_until_ready(amplitude_to_db(x, stype="power", top_db=None))
    out_top1 = jax.block_until_ready(amplitude_to_db(x, stype="power", top_db=80.0))
    out_top2 = jax.block_until_ready(    # force the tiled two-pass path
        amplitude_to_db(x, stype="power", top_db=80.0, force_two_pass=True))

    ref_none = _reference_amp_to_db(x, stype="power", top_db=None)
    ref_top = _reference_amp_to_db(x, stype="power", top_db=80.0)
    assert out_none.shape == x.shape and out_none.dtype == x.dtype
    assert bool(jnp.allclose(out_none, ref_none, atol=1e-3, rtol=1e-4))
    assert bool(jnp.allclose(out_top1, ref_top, atol=1e-3, rtol=1e-4))
    assert bool(jnp.allclose(out_top2, ref_top, atol=1e-3, rtol=1e-4))

    # Ragged case (n % 128 != 0): exercises the pad + slice fallback, magnitude scale.
    y = jax.random.uniform(jax.random.PRNGKey(1), (2, 3, 9, 17), dtype=jnp.float32)
    out_y1 = jax.block_until_ready(amplitude_to_db(y, stype="magnitude", top_db=60.0))
    out_y2 = jax.block_until_ready(
        amplitude_to_db(y, stype="magnitude", top_db=60.0, force_two_pass=True))
    ref_y = _reference_amp_to_db(y, stype="magnitude", top_db=60.0)
    assert bool(jnp.allclose(out_y1, ref_y, atol=1e-3, rtol=1e-4))
    assert bool(jnp.allclose(out_y2, ref_y, atol=1e-3, rtol=1e-4))

    # bf16 input: exercises 16-row sublane granularity and in-kernel f32 upcast.
    xb = x.astype(jnp.bfloat16)
    out_b = jax.block_until_ready(amplitude_to_db(xb, stype="power", top_db=None))
    ref_b = _reference_amp_to_db(xb.astype(jnp.float32), stype="power", top_db=None)
    assert out_b.dtype == jnp.bfloat16
    assert bool(jnp.allclose(out_b.astype(jnp.float32), ref_b, atol=1.0, rtol=0.05))

    print("KERNEL_OK")
</pallas_src>

<mosaic_0001>
module attributes {stable_mosaic.version = 11 : i64} {
  func.func @_elementwise_db_kernel(%arg0: i32, %arg1: memref<1x1x2048xf32, #tpu.memory_space<vmem>>, %arg2: memref<1x1x2048xf32, #tpu.memory_space<vmem>>) attributes {dimension_semantics = [#tpu.dimension_semantics<parallel>], iteration_bounds = array<i64: 1>, scalar_prefetch = 0 : i64, scratch_operands = 0 : i64, tpu.core_type = #tpu.core_type<tc>, window_params = [{transform_indices = @transform_0, window_bounds = array<i64: 1, 1, 2048>}, {transform_indices = @transform_1, window_bounds = array<i64: 1, 1, 2048>}]} {
    %c0 = arith.constant 0 : index
    %c0_0 = arith.constant 0 : index
    %c0_1 = arith.constant 0 : index
    %0 = vector.load %arg1[%c0, %c0_0, %c0_1] : memref<1x1x2048xf32, #tpu.memory_space<vmem>>, vector<1x1x2048xf32>
    %cst = arith.constant 1.000000e-10 : f32
    %1 = vector.broadcast %cst : f32 to vector<1x1x2048xf32>
    %2 = arith.maximumf %0, %1 : vector<1x1x2048xf32>
    %3 = math.log %2 : vector<1x1x2048xf32>
    %cst_2 = arith.constant 4.34294462 : f32
    %4 = vector.broadcast %cst_2 : f32 to vector<1x1x2048xf32>
    %5 = arith.mulf %4, %3 : vector<1x1x2048xf32>
    %c0_3 = arith.constant 0 : index
    %c0_4 = arith.constant 0 : index
    %c0_5 = arith.constant 0 : index
    %6 = vector.load %arg2[%c0_3, %c0_4, %c0_5] : memref<1x1x2048xf32, #tpu.memory_space<vmem>>, vector<1x1x2048xf32>
    tpu.vector_store %arg2[%c0_3, %c0_4, %c0_5], %5 {strides = array<i32>} : memref<1x1x2048xf32, #tpu.memory_space<vmem>>, vector<1x1x2048xf32>,
    return
  }
  func.func @transform_0(%arg0: i32) -> (i32, i32, i32) {
    %c0_i32 = arith.constant 0 : i32
    %c0_i32_0 = arith.constant 0 : i32
    %c0_i32_1 = arith.constant 0 : i32
    return %c0_i32, %arg0, %c0_i32_0 : i32, i32, i32
  }
  func.func @transform_1(%arg0: i32) -> (i32, i32, i32) {
    %c0_i32 = arith.constant 0 : i32
    %c0_i32_0 = arith.constant 0 : i32
    %c0_i32_1 = arith.constant 0 : i32
    return %c0_i32, %arg0, %c0_i32_0 : i32, i32, i32
  }
}

</mosaic_0001>

<llo_original>
// kernel: _amplitude_to_db.1
$region0: #{_amplitude_to_db.1}
  #allocation0 [shape = 'u32[]', space=smem, size = 0x4, offset = 0x4, fixed_abs, tag = 'smem constant byte address 0x4 - core index']
  #allocation1 [shape = 'u32[144,128]{1,0:T(1,128)}', space=vmem, size = 0x12000, scoped, tag = 'internal scratch']
  %s0 = inlined_call_operand.vmem [shape: f32[1,1,2048], index: 0, kind: input, shape index: {}]
  %s1 = inlined_call_operand.vmem [shape: f32[1,1,2048], index: 1, kind: output, shape index: {}]
  %s2 = sld [smem:[#allocation0]]
  $region14: #{_amplitude_to_db.1} parent=0
    _
  %s4 = ssub.s32 1, %s2
  %s5 = scalar_select 0, %s4, %s2
  // Predicated region
  $region2: #{_amplitude_to_db.1} parent=0 // pred_check
    _
  $region3: #{_amplitude_to_db.1} parent=0 // pred_check_branch
    %7 = sbr.rel (0) target = $region5
  $region4: #{_amplitude_to_db.1} parent=0 // pred_region
    _
  $region5: #{_amplitude_to_db.1} parent=0 // pred_fallthru
    _
  %v8 = vld [vmem:[%s0] sm:$0xff]
  %v9 = vld [vmem:[%s0 + $0x8] sm:$0xff]
  %v10 = vmax.f32 %v8, 1e-10
  %v11 = vmax.f32 %v9, 1e-10
  %v12 = vlog2.pop %v10
  %v13 = vmul.f32 %v12, 0.6931472
  %v14 = vlog2.pop %v11
  %v15 = vmul.f32 %v14, 0.6931472
  %v16 = vmul.f32 %v13, 4.3429446
  %v17 = vmul.f32 %v15, 4.3429446
  %18 = vst [vmem:[%s1] sm:$0xff] %v16
  %19 = vst [vmem:[%s1 + $0x8] sm:$0xff] %v17
  // Predicated region
  $region6: #{_amplitude_to_db.1} parent=0 // pred_check
    _
  $region7: #{_amplitude_to_db.1} parent=0 // pred_check_branch
    %21 = sbr.rel (0) target = $region9
  $region8: #{_amplitude_to_db.1} parent=0 // pred_region
    _
  $region9: #{_amplitude_to_db.1} parent=0 // pred_fallthru
    _
  // Predicated region
  $region10: #{_amplitude_to_db.1} parent=0 // pred_check
    _
  $region11: #{_amplitude_to_db.1} parent=0 // pred_check_branch
    %23 = sbr.rel (0) target = $region13
  $region12: #{_amplitude_to_db.1} parent=0 // pred_region
    _
  $region13: #{_amplitude_to_db.1} parent=0 // pred_fallthru
    _

</llo_original>
